<compile_context>
chip_gen: v5e
topology: v5e:2x2
jax: 0.10.0
libtpu: 0.0.40
codegen_flags: <defaults>
</compile_context>

<pallas_src>
import jax
import jax.numpy as jnp
from jax.experimental import pallas as pl
from jax.experimental.pallas import tpu as pltpu


_LANES = 128                 # vreg lane count
_SUBLANES = 8                # f32 sublanes per vreg
_VREG_ELEMS = _LANES * _SUBLANES   # 1024 f32 elements per vreg


def _round_up(n: int, m: int) -> int:
    return ((n + m - 1) // m) * m


def _choose_tile_rows(n_rows: int, tm_rows: int) -> int:
    """Pick the per-step row tile (multiple of 8) for an (n_rows, 128) slab."""
    t = min(tm_rows, n_rows)
    # Prefer a few grid steps so the "parallel" axis can shard across v7x's two
    # TensorCores and the BlockSpec pipeline has DMAs to overlap with compute.
    if n_rows >= 4 * _SUBLANES:
        target_steps = 4
    elif n_rows >= 2 * _SUBLANES:
        target_steps = 2
    else:
        target_steps = 1
    t = min(t, max(_SUBLANES, _round_up(pl.cdiv(n_rows, target_steps), _SUBLANES)))
    return t


def _svm_linear_kernel(w_ref, b_ref, xt_ref, o_ref):
    # w_ref : SMEM (2,)            f32 -- weight scalars
    # b_ref : SMEM (1,)            f32 -- bias scalar
    # xt_ref: VMEM (2, TM, 128)    f32 -- feature-major, sublane+lane-dense tile
    # o_ref : VMEM (TM, 128)       f32 -- dense output tile
    w0 = w_ref[0]
    w1 = w_ref[1]
    b0 = b_ref[0]
    x0 = xt_ref[0]                 # (TM, 128) slab, full vregs
    x1 = xt_ref[1]                 # (TM, 128) slab, full vregs
    # Pure VPU: two scalar-broadcast multiplies + two adds per element.
    o_ref[...] = (x0 * w0 + x1 * w1 + b0).astype(o_ref.dtype)


def gaussian_svm_forward(x, w, b, *, tm_rows: int = 4096):
    """nn.Linear(2, 1) forward: x [N, 2], w [2, 1], b [1] -> [N, 1] float32."""
    N, in_features = x.shape
    assert in_features == 2, "GaussianSVM expects 2 input features"
    out_features = w.shape[1] if w.ndim == 2 else 1
    assert out_features == 1, "kernel implements a single output feature"

    # Cap the double-buffered VMEM footprint (~3072 * tm_rows bytes) at ~24 MiB
    # so it fits comfortably on v5e/v6e and v7x's smaller 64 MiB VMEM.
    tm_rows = max(_SUBLANES, min(int(tm_rows), 8192))
    tm_rows = _round_up(tm_rows, _SUBLANES)

    w_flat = w.reshape(-1).astype(jnp.float32)   # (2,) scalars -> SMEM
    b_flat = b.reshape(-1).astype(jnp.float32)   # (1,) scalar  -> SMEM

    # Layout plumbing: feature-major, padded to a whole number of f32 vregs and
    # reshaped to a dense (2, n_rows, 128) slab (lane- and sublane-dense).
    # TODO(synk): store x feature-major upstream to eliminate this transpose;
    # it is the dominant remaining end-to-end HBM cost for this memory-bound op.
    xt = jnp.transpose(x.astype(jnp.float32))    # (2, N)
    n_elems = _round_up(N, _VREG_ELEMS)
    if n_elems != N:
        xt = jnp.pad(xt, ((0, 0), (0, n_elems - N)))
    n_rows = n_elems // _LANES                   # multiple of 8
    xt = xt.reshape(2, n_rows, _LANES)

    t = _choose_tile_rows(n_rows, tm_rows)
    grid = (pl.cdiv(n_rows, t),)                 # ragged last block is masked

    out = pl.pallas_call(
        _svm_linear_kernel,
        out_shape=jax.ShapeDtypeStruct((n_rows, _LANES), jnp.float32),
        grid=grid,
        in_specs=[
            pl.BlockSpec(memory_space=pltpu.MemorySpace.SMEM),       # w scalars
            pl.BlockSpec(memory_space=pltpu.MemorySpace.SMEM),       # b scalar
            pl.BlockSpec((2, t, _LANES), lambda i: (0, i, 0)),       # x tile
        ],
        out_specs=pl.BlockSpec((t, _LANES), lambda i: (i, 0)),
        compiler_params=pltpu.CompilerParams(
            dimension_semantics=("parallel",),    # independent tiles -> megacore
            vmem_limit_bytes=32 * 1024 * 1024,    # raise v5e's 16 MiB default
        ),
        cost_estimate=pl.CostEstimate(
            flops=4 * n_elems,                    # 2 mul + 2 add per row
            transcendentals=0,
            bytes_accessed=4 * (2 * n_elems + n_elems + 3),
        ),
    )(w_flat, b_flat, xt)

    # Dense (n_rows, 128) slab -> (N, 1), matching PyTorch nn.Linear(2, 1).
    return out.reshape(-1)[:N].reshape(N, out_features)


if __name__ == "__main__":
    key = jax.random.PRNGKey(0)
    kx, kw, kb = jax.random.split(key, 3)

    # nn.Linear(2, 1) parameters: weight (1, 2) stored transposed as (2, 1), bias (1,).
    bound = 1.0 / jnp.sqrt(2.0)
    w = jax.random.uniform(kw, (2, 1), jnp.float32, -bound, bound)
    b = jax.random.uniform(kb, (1,), jnp.float32, -bound, bound)

    # Small batch (matches the module's 2-feature input).
    x = jax.random.normal(kx, (8, 2), jnp.float32)
    out = jax.block_until_ready(gaussian_svm_forward(x, w, b))
    ref = x @ w + b.reshape(1, 1)
    assert out.shape == (8, 1)
    assert jnp.allclose(out, ref, atol=1e-5, rtol=1e-5)

    # Exercise the multi-tile + ragged-last-block + padding path
    # (N=2500 -> 24 rows of 128, tile=16 rows -> grid=(2,), last block = 8 rows).
    x2 = jax.random.normal(kx, (2500, 2), jnp.float32)
    out2 = jax.block_until_ready(gaussian_svm_forward(x2, w, b, tm_rows=16))
    ref2 = x2 @ w + b.reshape(1, 1)
    assert out2.shape == (2500, 1)
    assert jnp.allclose(out2, ref2, atol=1e-5, rtol=1e-5)

    print("KERNEL_OK")
</pallas_src>

<mosaic_0001>
module attributes {stable_mosaic.version = 11 : i64} {
  func.func @_svm_linear_kernel(%arg0: i32, %arg1: memref<2xf32, #tpu.memory_space<smem>>, %arg2: memref<1xf32, #tpu.memory_space<smem>>, %arg3: memref<2x8x128xf32, #tpu.memory_space<vmem>>, %arg4: memref<8x128xf32, #tpu.memory_space<vmem>>) attributes {dimension_semantics = [#tpu.dimension_semantics<parallel>], iteration_bounds = array<i64: 1>, scalar_prefetch = 0 : i64, scratch_operands = 0 : i64, tpu.core_type = #tpu.core_type<tc>, window_params = [{transform_indices = @transform_0, window_bounds = array<i64: 2>}, {transform_indices = @transform_1, window_bounds = array<i64: 1>}, {transform_indices = @transform_2, window_bounds = array<i64: 2, 8, 128>}, {transform_indices = @transform_3, window_bounds = array<i64: 8, 128>}]} {
    %c0 = arith.constant 0 : index
    %0 = memref.load %arg1[%c0] : memref<2xf32, #tpu.memory_space<smem>>
    %c1 = arith.constant 1 : index
    %1 = memref.load %arg1[%c1] : memref<2xf32, #tpu.memory_space<smem>>
    %c0_0 = arith.constant 0 : index
    %2 = memref.load %arg2[%c0_0] : memref<1xf32, #tpu.memory_space<smem>>
    %c0_1 = arith.constant 0 : index
    %c0_2 = arith.constant 0 : index
    %c0_3 = arith.constant 0 : index
    %3 = vector.load %arg3[%c0_1, %c0_2, %c0_3] : memref<2x8x128xf32, #tpu.memory_space<vmem>>, vector<1x8x128xf32>
    %4 = vector.shape_cast %3 : vector<1x8x128xf32> to vector<8x128xf32>
    %c1_4 = arith.constant 1 : index
    %c0_5 = arith.constant 0 : index
    %c0_6 = arith.constant 0 : index
    %5 = vector.load %arg3[%c1_4, %c0_5, %c0_6] : memref<2x8x128xf32, #tpu.memory_space<vmem>>, vector<1x8x128xf32>
    %6 = vector.shape_cast %5 : vector<1x8x128xf32> to vector<8x128xf32>
    %7 = vector.broadcast %0 : f32 to vector<8x128xf32>
    %8 = arith.mulf %4, %7 : vector<8x128xf32>
    %9 = vector.broadcast %1 : f32 to vector<8x128xf32>
    %10 = arith.mulf %6, %9 : vector<8x128xf32>
    %11 = arith.addf %8, %10 : vector<8x128xf32>
    %12 = vector.broadcast %2 : f32 to vector<8x128xf32>
    %13 = arith.addf %11, %12 : vector<8x128xf32>
    %c0_7 = arith.constant 0 : index
    %c0_8 = arith.constant 0 : index
    %14 = vector.load %arg4[%c0_7, %c0_8] : memref<8x128xf32, #tpu.memory_space<vmem>>, vector<8x128xf32>
    tpu.vector_store %arg4[%c0_7, %c0_8], %13 {strides = array<i32>} : memref<8x128xf32, #tpu.memory_space<vmem>>, vector<8x128xf32>,
    return
  }
  func.func @transform_0(%arg0: i32) -> i32 {
    %c0_i32 = arith.constant 0 : i32
    %c0_i32_0 = arith.constant 0 : i32
    return %c0_i32 : i32
  }
  func.func @transform_1(%arg0: i32) -> i32 {
    %c0_i32 = arith.constant 0 : i32
    %c0_i32_0 = arith.constant 0 : i32
    return %c0_i32 : i32
  }
  func.func @transform_2(%arg0: i32) -> (i32, i32, i32) {
    %c0_i32 = arith.constant 0 : i32
    %c0_i32_0 = arith.constant 0 : i32
    %c0_i32_1 = arith.constant 0 : i32
    return %c0_i32, %arg0, %c0_i32_0 : i32, i32, i32
  }
  func.func @transform_3(%arg0: i32) -> (i32, i32) {
    %c0_i32 = arith.constant 0 : i32
    %c0_i32_0 = arith.constant 0 : i32
    return %arg0, %c0_i32 : i32, i32
  }
}

</mosaic_0001>

<llo_original>
// kernel: tpu_custom_call.1
$region0: #{tpu_custom_call.1}
  #allocation0 [shape = 'u32[]', space=smem, size = 0x4, offset = 0x4, fixed_abs, tag = 'smem constant byte address 0x4 - core index']
  #allocation1 [shape = 'u32[72,128]{1,0:T(1,128)}', space=vmem, size = 0x9000, scoped, tag = 'internal scratch']
  #allocation2 [shape = 'f32[1]{0:T(128)S(6)}', space=smem, size = 0x200, scoped, tag = 'scoped memory for tpu_custom_call.1']
  %s0 = inlined_call_operand.vmem [shape: f32[2], index: 0, kind: input, shape index: {}]
  %s1 = inlined_call_operand.<no memory space> [shape: f32[1], index: 1, kind: input, shape index: {}]
  %s2 = inlined_call_operand.hbm [shape: f32[2,8,128], index: 2, kind: input, shape index: {}]
  %s3 = inlined_call_operand.hbm [shape: f32[8,128], index: 3, kind: output, shape index: {}]
  %s4 = sld [smem:[#allocation0]]
  $region30: #{tpu_custom_call.1} parent=0
    _
  %s6 = ssub.s32 1, %s4
  %s7 = scalar_select 0, %s6, %s4
  %8 = sst [smem:[#allocation2]] %s1
  $region1: #{tpu_custom_call.1} parent=0
    #allocation3 [shape = 'u8[512]{0}', space=smem, size = 0x200, scoped, tag = 'input window, operand 0, single buffered']
    #allocation4 [shape = 's32[1]{0}', space=sflag, size = 0x4, scoped, tag = 'scoped memory for tpu_custom_call.1']
    #allocation5 [shape = 's32[1]{0}', space=sflag, size = 0x4, scoped, tag = 'scoped memory for tpu_custom_call.1']
    #allocation6 [shape = 's32[1]{0}', space=sflag, size = 0x4, scoped, tag = 'scoped memory for tpu_custom_call.1']
    #allocation7 [shape = 'u8[8192]{0}', space=vmem, size = 0x2000, scoped, tag = 'input window, operand 2, single buffered']
    #allocation8 [shape = 'u8[4096]{0}', space=vmem, size = 0x1000, scoped, tag = 'output window, operand 0, single buffered']
    %9 = vsyncpa [#allocation6], 0
    %10 = vsyncpa [#allocation4], 0
    %11 = vsyncpa [#allocation5], 0
    // Predicated region
    $region2: #{tpu_custom_call.1} parent=1 // pred_check
      _
    $region3: #{tpu_custom_call.1} parent=1 // pred_check_branch
      %13 = sbr.rel (0) target = $region5
    $region4: #{tpu_custom_call.1} parent=1 // pred_region
      %15 = vsyncadd [#allocation6], 0
      %s17 = sshll.u32 %s0, 4
      %s18 = int_to_ptr.vmem [resolvable:$true] %s17
      %20 = dma.vmem_to_smem %s18, 16, [#allocation3], [#allocation6]
    $region5: #{tpu_custom_call.1} parent=1 // pred_fallthru
      _
    // Predicated region
    $region6: #{tpu_custom_call.1} parent=1 // pred_check
      _
    $region7: #{tpu_custom_call.1} parent=1 // pred_check_branch
      %22 = sbr.rel (0) target = $region9
    $region8: #{tpu_custom_call.1} parent=1 // pred_region
      _
    $region9: #{tpu_custom_call.1} parent=1 // pred_fallthru
      _
    // Predicated region
    $region10: #{tpu_custom_call.1} parent=1 // pred_check
      _
    $region11: #{tpu_custom_call.1} parent=1 // pred_check_branch
      %24 = sbr.rel (0) target = $region13
    $region12: #{tpu_custom_call.1} parent=1 // pred_region
      %26 = vsyncadd [#allocation4], 0
      %s27 = sshll.u32 %s2, 4
      %s28 = int_to_ptr.hbm [resolvable:$true] %s27
      %s29 = sshll.u32 [#allocation7], 4
      %s30 = int_to_ptr.vmem [resolvable:$true] %s29
      %35 = dma.hbm_to_vmem [thread:$0]  %s28, 256, %s30, [#allocation4], 128, 128, 8
    $region13: #{tpu_custom_call.1} parent=1 // pred_fallthru
      _
    // Predicated region
    $region14: #{tpu_custom_call.1} parent=1 // pred_check
      _
    $region15: #{tpu_custom_call.1} parent=1 // pred_check_branch
      %37 = sbr.rel (0) target = $region17
    $region16: #{tpu_custom_call.1} parent=1 // pred_region
      %39 = dma.done [#allocation6], 16
    $region17: #{tpu_custom_call.1} parent=1 // pred_fallthru
      _
    // Predicated region
    $region18: #{tpu_custom_call.1} parent=1 // pred_check
      _
    $region19: #{tpu_custom_call.1} parent=1 // pred_check_branch
      %41 = sbr.rel (0) target = $region21
    $region20: #{tpu_custom_call.1} parent=1 // pred_region
      %43 = dma.done [#allocation4], 256
    $region21: #{tpu_custom_call.1} parent=1 // pred_fallthru
      _
    %44 = sfence
    %s45 = sld [smem:[#allocation3]]
    %s46 = sld [smem:[#allocation3 + $0x1]]
    %s47 = sld [smem:[#allocation2]]
    %v48 = vld [vmem:[#allocation7] sm:$0xff]
    %s49 = scalar_lea.vmem [#allocation7], 8
    %v50 = vld [vmem:[%s49] sm:$0xff]
    %v51 = vstv %s45
    %v52 = vmul.f32 %v48, %v51
    %v53 = vstv %s46
    %v54 = vmul.f32 %v50, %v53
    %v55 = vadd.f32 %v52, %v54
    %v56 = vstv %s47
    %v57 = vadd.f32 %v55, %v56
    %58 = vst [vmem:[#allocation8] sm:$0xff] %v57
    // Predicated region
    $region22: #{tpu_custom_call.1} parent=1 // pred_check
      _
    $region23: #{tpu_custom_call.1} parent=1 // pred_check_branch
      %60 = sbr.rel (0) target = $region25
    $region24: #{tpu_custom_call.1} parent=1 // pred_region
      %62 = vsyncadd [#allocation5], 0
      %s64 = sshll.u32 [#allocation8], 4
      %s65 = int_to_ptr.vmem [resolvable:$true] %s64
      %s66 = sshll.u32 %s3, 4
      %s67 = int_to_ptr.hbm [resolvable:$true] %s66
      %69 = dma.vmem_to_hbm [thread:$0]  %s65, 128, %s67, [#allocation5]
    $region25: #{tpu_custom_call.1} parent=1 // pred_fallthru
      _
    // Predicated region
    $region26: #{tpu_custom_call.1} parent=1 // pred_check
      _
    $region27: #{tpu_custom_call.1} parent=1 // pred_check_branch
      %71 = sbr.rel (0) target = $region29
    $region28: #{tpu_custom_call.1} parent=1 // pred_region
      %73 = dma.done [#allocation5], 128
    $region29: #{tpu_custom_call.1} parent=1 // pred_fallthru
      _
    %74 = vsyncpa [#allocation4], 1
    %75 = vsyncpa [#allocation5], 1
    %76 = vsyncpa [#allocation6], 1

</llo_original>
